<compile_context>
chip_gen: v6e
topology: v6e:2x2x1
jax: 0.10.0
libtpu: 0.0.40
codegen_flags: <defaults>
</compile_context>

<pallas_src>
import jax
import jax.numpy as jnp
from jax.experimental import pallas as pl
from jax.experimental.pallas import tpu as pltpu

HEAD_DIMS = (768, 1024, 128, 64, 16, 1)   # Linear layer sizes of the MLP head
IN_DIM = HEAD_DIMS[0]
LANE = 128                                # TPU lane width


def _round_up(x, m):
    return ((x + m - 1) // m) * m


def _choose_batch_tile(b_padded):
    """b_padded is a multiple of 128; prefer big tiles with >=2 grid steps (v7x)."""
    for tb in (512, 256, 128):
        if b_padded % tb == 0 and b_padded // tb >= 2:
            return tb
    return min(b_padded, 512)


# ---------------------------------------------------------------------------
# One-time (model-load) parameter collapse -- hoisted out of the jitted forward.
# ---------------------------------------------------------------------------
def collapse_params(params):
    """Fold the 5 Linear layers into one affine map; pad to 128 lanes; W -> bf16."""
    (w_eff, b_eff), rest = params[0], params[1:]
    w_eff = jnp.asarray(w_eff, jnp.float32)
    b_eff = jnp.asarray(b_eff, jnp.float32).reshape(1, -1)
    for w, b in rest:                       # exact in f32: the head is purely affine
        w = jnp.asarray(w, jnp.float32)
        b = jnp.asarray(b, jnp.float32).reshape(1, -1)
        w_eff = w_eff @ w
        b_eff = b_eff @ w + b
    w_pad = jnp.zeros((IN_DIM, LANE), jnp.float32).at[:, :1].set(w_eff)
    b_pad = jnp.zeros((1, LANE), jnp.float32).at[:, :1].set(b_eff)
    return w_pad.astype(jnp.bfloat16), b_pad   # bf16 MXU operand, f32 bias


# ---------------------------------------------------------------------------
# Kernel: one MXU pass per batch tile, lane-dense (1, TB) score row out.
# ---------------------------------------------------------------------------
def mlp_head_kernel(x_ref, w_ref, b_ref, out_ref):
    # x_ref:   (TB, 768) f32          w_ref: (768, 128) bf16 (only col 0 nonzero)
    # b_ref:   (1, 128)  f32          out_ref: (1, 1, TB) f32
    x = x_ref[...].astype(jnp.bfloat16)                 # VPU cast, hidden under DMA
    acc = jnp.dot(x, w_ref[...],
                  preferred_element_type=jnp.float32) + b_ref[...]   # (TB, 128) f32
    # (TB,128) -> (128,TB) XLU transpose; row 0 is the score column -> lane-dense row.
    out_ref[...] = jnp.transpose(acc)[None, 0:1, :]


@jax.jit
def mlp_forward(embed, w_pad, b_pad):
    """Equivalent of MLP.forward(embed): (B, 768) -> (B, 1) f32 scores."""
    B = embed.shape[0]
    B_padded = _round_up(max(B, 1), LANE)
    TB = _choose_batch_tile(B_padded)
    n_tiles = B_padded // TB

    x = embed.astype(jnp.float32)
    if B_padded != B:
        x = jnp.pad(x, ((0, B_padded - B), (0, 0)))     # zero rows -> ignored scores

    out = pl.pallas_call(
        mlp_head_kernel,
        out_shape=jax.ShapeDtypeStruct((n_tiles, 1, TB), jnp.float32),
        grid=(n_tiles,),
        in_specs=[
            pl.BlockSpec((TB, IN_DIM), lambda i: (i, 0)),     # batch-tiled input
            pl.BlockSpec((IN_DIM, LANE), lambda i: (0, 0)),   # resident collapsed weight
            pl.BlockSpec((1, LANE), lambda i: (0, 0)),        # resident collapsed bias
        ],
        out_specs=pl.BlockSpec((1, 1, TB), lambda i: (i, 0, 0)),   # lane-dense score rows
        compiler_params=pltpu.CompilerParams(
            dimension_semantics=("parallel",)),               # shards over 2 TCs on v7x
    )(x, w_pad, b_pad)

    return out.reshape(-1)[:B, None]                          # (B, 1), matches PyTorch


# ---------------------------------------------------------------------------
# Deterministic parameter construction + pure-JAX 5-layer reference
# ---------------------------------------------------------------------------
def init_params(key):
    head = []
    keys = jax.random.split(key, 2 * (len(HEAD_DIMS) - 1))
    for li, (din, dout) in enumerate(zip(HEAD_DIMS[:-1], HEAD_DIMS[1:])):
        w = jax.random.normal(keys[2 * li], (din, dout), jnp.float32) * (din ** -0.5)
        b = jax.random.normal(keys[2 * li + 1], (1, dout), jnp.float32) * 0.01
        head.append((w, b))
    return head


def mlp_reference(embed, params):
    h = embed.astype(jnp.float32)
    for w, b in params:                  # Dropout is identity at inference
        h = h @ w + b
    return h


if __name__ == "__main__":
    key = jax.random.PRNGKey(0)
    k_x, k_p = jax.random.split(key)

    B = 2
    embed = jax.random.normal(k_x, (B, IN_DIM), jnp.float32)
    params = init_params(k_p)

    w_pad, b_pad = collapse_params(params)     # one-time prep, outside the jit
    scores = mlp_forward(embed, w_pad, b_pad)
    scores = jax.block_until_ready(scores)

    ref = mlp_reference(embed, params)
    assert scores.shape == (B, 1) and scores.dtype == jnp.float32
    assert bool(jnp.allclose(scores, ref, atol=5e-2, rtol=5e-2)), (scores, ref)
    print("KERNEL_OK")
</pallas_src>

<mosaic_0001>
module attributes {stable_mosaic.version = 11 : i64} {
  func.func @mlp_head_kernel(%arg0: i32, %arg1: memref<128x768xf32, #tpu.memory_space<vmem>>, %arg2: memref<768x128xbf16, #tpu.memory_space<vmem>>, %arg3: memref<1x128xf32, #tpu.memory_space<vmem>>, %arg4: memref<1x1x128xf32, #tpu.memory_space<vmem>>) attributes {dimension_semantics = [#tpu.dimension_semantics<parallel>], iteration_bounds = array<i64: 1>, scalar_prefetch = 0 : i64, scratch_operands = 0 : i64, tpu.core_type = #tpu.core_type<tc>, window_params = [{transform_indices = @transform_0, window_bounds = array<i64: 128, 768>}, {pipeline_mode = #tpu.pipeline_mode<synchronous>, transform_indices = @transform_1, window_bounds = array<i64: 768, 128>}, {pipeline_mode = #tpu.pipeline_mode<synchronous>, transform_indices = @transform_2, window_bounds = array<i64: 1, 128>}, {transform_indices = @transform_3, window_bounds = array<i64: 1, 1, 128>}]} {
    %c0 = arith.constant 0 : index
    %c0_0 = arith.constant 0 : index
    %0 = vector.load %arg1[%c0, %c0_0] : memref<128x768xf32, #tpu.memory_space<vmem>>, vector<128x768xf32>
    %1 = arith.truncf %0 : vector<128x768xf32> to vector<128x768xbf16>
    %c0_1 = arith.constant 0 : index
    %c0_2 = arith.constant 0 : index
    %2 = vector.load %arg2[%c0_1, %c0_2] : memref<768x128xbf16, #tpu.memory_space<vmem>>, vector<768x128xbf16>
    %cst = arith.constant dense<0.000000e+00> : vector<128x128xf32>
    %3 = tpu.matmul %1, %2, %cst {dimension_numbers = #tpu.dot_dimension_numbers<[1], [0], [0], [1], [0, 0, 1, 1], [], []>} : vector<128x768xbf16>, vector<768x128xbf16>, vector<128x128xf32> -> vector<128x128xf32>
    %c0_3 = arith.constant 0 : index
    %c0_4 = arith.constant 0 : index
    %4 = vector.load %arg3[%c0_3, %c0_4] : memref<1x128xf32, #tpu.memory_space<vmem>>, vector<1x128xf32>
    %5 = vector.broadcast %4 : vector<1x128xf32> to vector<128x128xf32>
    %6 = arith.addf %3, %5 : vector<128x128xf32>
    %7 = tpu.transpose %6, [1, 0] : vector<128x128xf32> -> vector<128x128xf32>
    %8 = vector.extract_strided_slice %7 {offsets = [0, 0], sizes = [1, 128], strides = [1, 1]} : vector<128x128xf32> to vector<1x128xf32>
    %9 = vector.shape_cast %8 : vector<1x128xf32> to vector<1x1x128xf32>
    %c0_5 = arith.constant 0 : index
    %c0_6 = arith.constant 0 : index
    %c0_7 = arith.constant 0 : index
    %10 = vector.load %arg4[%c0_5, %c0_6, %c0_7] : memref<1x1x128xf32, #tpu.memory_space<vmem>>, vector<1x1x128xf32>
    tpu.vector_store %arg4[%c0_5, %c0_6, %c0_7], %9 {strides = array<i32>} : memref<1x1x128xf32, #tpu.memory_space<vmem>>, vector<1x1x128xf32>,
    return
  }
  func.func @transform_0(%arg0: i32) -> (i32, i32) {
    %c0_i32 = arith.constant 0 : i32
    %c0_i32_0 = arith.constant 0 : i32
    return %arg0, %c0_i32 : i32, i32
  }
  func.func @transform_1(%arg0: i32) -> (i32, i32) {
    %c0_i32 = arith.constant 0 : i32
    %c0_i32_0 = arith.constant 0 : i32
    %c0_i32_1 = arith.constant 0 : i32
    return %c0_i32, %c0_i32_0 : i32, i32
  }
  func.func @transform_2(%arg0: i32) -> (i32, i32) {
    %c0_i32 = arith.constant 0 : i32
    %c0_i32_0 = arith.constant 0 : i32
    %c0_i32_1 = arith.constant 0 : i32
    return %c0_i32, %c0_i32_0 : i32, i32
  }
  func.func @transform_3(%arg0: i32) -> (i32, i32, i32) {
    %c0_i32 = arith.constant 0 : i32
    %c0_i32_0 = arith.constant 0 : i32
    %c0_i32_1 = arith.constant 0 : i32
    return %arg0, %c0_i32, %c0_i32_0 : i32, i32, i32
  }
}

</mosaic_0001>

<llo_original>
// kernel: mlp_forward.1
$region0: #{mlp_forward.1}
  #allocation0 [shape = 'u32[]', space=smem, size = 0x4, offset = 0x4, fixed_abs, tag = 'smem constant byte address 0x4 - core index']
  #allocation1 [shape = 'u32[144,128]{1,0:T(1,128)}', space=vmem, size = 0x12000, scoped, tag = 'internal scratch']
  %s0 = inlined_call_operand.vmem [shape: f32[128,768], index: 0, kind: input, shape index: {}]
  %s1 = inlined_call_operand.vmem [shape: bf16[768,128], index: 1, kind: input, shape index: {}]
  %s2 = inlined_call_operand.vmem [shape: f32[1,128], index: 2, kind: input, shape index: {}]
  %s3 = inlined_call_operand.vmem [shape: f32[1,1,128], index: 3, kind: output, shape index: {}]
  %s4 = sld [smem:[#allocation0]]
  $region22: #{mlp_forward.1} parent=0
    _
  %s6 = ssub.s32 1, %s4
  %s7 = scalar_select 0, %s6, %s4
  // Predicated region
  $region2: #{mlp_forward.1} parent=0 // pred_check
    _
  $region3: #{mlp_forward.1} parent=0 // pred_check_branch
    %9 = sbr.rel (0) target = $region5
  $region4: #{mlp_forward.1} parent=0 // pred_region
    _
  $region5: #{mlp_forward.1} parent=0 // pred_fallthru
    _
  // Predicated region
  $region6: #{mlp_forward.1} parent=0 // pred_check
    _
  $region7: #{mlp_forward.1} parent=0 // pred_check_branch
    %11 = sbr.rel (0) target = $region9
  $region8: #{mlp_forward.1} parent=0 // pred_region
    _
  $region9: #{mlp_forward.1} parent=0 // pred_fallthru
    _
  // Predicated region
  $region10: #{mlp_forward.1} parent=0 // pred_check
    _
  $region11: #{mlp_forward.1} parent=0 // pred_check_branch
    %13 = sbr.rel (0) target = $region13
  $region12: #{mlp_forward.1} parent=0 // pred_region
    _
  $region13: #{mlp_forward.1} parent=0 // pred_fallthru
    _
  %v15 = vld [vmem:[%s0] sm:$0xff]
  %v16 = vld [vmem:[%s0 + $0x8] sm:$0xff]
  %v17 = vld [vmem:[%s0 + $0x10] sm:$0xff]
  %v18 = vld [vmem:[%s0 + $0x18] sm:$0xff]
  %v19 = vld [vmem:[%s0 + $0x20] sm:$0xff]
  %v20 = vld [vmem:[%s0 + $0x28] sm:$0xff]
  %v21 = vld [vmem:[%s0 + $0x30] sm:$0xff]
  %v22 = vld [vmem:[%s0 + $0x38] sm:$0xff]
  %v23 = vld [vmem:[%s0 + $0x40] sm:$0xff]
  %v24 = vld [vmem:[%s0 + $0x48] sm:$0xff]
  %v25 = vld [vmem:[%s0 + $0x50] sm:$0xff]
  %v26 = vld [vmem:[%s0 + $0x58] sm:$0xff]
  %v27 = vld [vmem:[%s0 + $0x60] sm:$0xff]
  %v28 = vld [vmem:[%s0 + $0x68] sm:$0xff]
  %v29 = vld [vmem:[%s0 + $0x70] sm:$0xff]
  %v30 = vld [vmem:[%s0 + $0x78] sm:$0xff]
  %v31 = vld [vmem:[%s0 + $0x80] sm:$0xff]
  %v32 = vld [vmem:[%s0 + $0x88] sm:$0xff]
  %v33 = vld [vmem:[%s0 + $0x90] sm:$0xff]
  %v34 = vld [vmem:[%s0 + $0x98] sm:$0xff]
  %v35 = vld [vmem:[%s0 + $0xa0] sm:$0xff]
  %v36 = vld [vmem:[%s0 + $0xa8] sm:$0xff]
  %v37 = vld [vmem:[%s0 + $0xb0] sm:$0xff]
  %v38 = vld [vmem:[%s0 + $0xb8] sm:$0xff]
  %v39 = vld [vmem:[%s0 + $0xc0] sm:$0xff]
  %v40 = vld [vmem:[%s0 + $0xc8] sm:$0xff]
  %v41 = vld [vmem:[%s0 + $0xd0] sm:$0xff]
  %v42 = vld [vmem:[%s0 + $0xd8] sm:$0xff]
  %v43 = vld [vmem:[%s0 + $0xe0] sm:$0xff]
  %v44 = vld [vmem:[%s0 + $0xe8] sm:$0xff]
  %v45 = vld [vmem:[%s0 + $0xf0] sm:$0xff]
  %v46 = vld [vmem:[%s0 + $0xf8] sm:$0xff]
  %v47 = vld [vmem:[%s0 + $0x100] sm:$0xff]
  %v48 = vld [vmem:[%s0 + $0x108] sm:$0xff]
  %v49 = vld [vmem:[%s0 + $0x110] sm:$0xff]
  %v50 = vld [vmem:[%s0 + $0x118] sm:$0xff]
  %v51 = vld [vmem:[%s0 + $0x120] sm:$0xff]
  %v52 = vld [vmem:[%s0 + $0x128] sm:$0xff]
  %v53 = vld [vmem:[%s0 + $0x130] sm:$0xff]
  %v54 = vld [vmem:[%s0 + $0x138] sm:$0xff]
  %v55 = vld [vmem:[%s0 + $0x140] sm:$0xff]
  %v56 = vld [vmem:[%s0 + $0x148] sm:$0xff]
  %v57 = vld [vmem:[%s0 + $0x150] sm:$0xff]
  %v58 = vld [vmem:[%s0 + $0x158] sm:$0xff]
  %v59 = vld [vmem:[%s0 + $0x160] sm:$0xff]
  %v60 = vld [vmem:[%s0 + $0x168] sm:$0xff]
  %v61 = vld [vmem:[%s0 + $0x170] sm:$0xff]
  %v62 = vld [vmem:[%s0 + $0x178] sm:$0xff]
  %v63 = vld [vmem:[%s0 + $0x180] sm:$0xff]
  %v64 = vld [vmem:[%s0 + $0x188] sm:$0xff]
  %v65 = vld [vmem:[%s0 + $0x190] sm:$0xff]
  %v66 = vld [vmem:[%s0 + $0x198] sm:$0xff]
  %v67 = vld [vmem:[%s0 + $0x1a0] sm:$0xff]
  %v68 = vld [vmem:[%s0 + $0x1a8] sm:$0xff]
  %v69 = vld [vmem:[%s0 + $0x1b0] sm:$0xff]
  %v70 = vld [vmem:[%s0 + $0x1b8] sm:$0xff]
  %v71 = vld [vmem:[%s0 + $0x1c0] sm:$0xff]
  %v72 = vld [vmem:[%s0 + $0x1c8] sm:$0xff]
  %v73 = vld [vmem:[%s0 + $0x1d0] sm:$0xff]
  %v74 = vld [vmem:[%s0 + $0x1d8] sm:$0xff]
  %v75 = vld [vmem:[%s0 + $0x1e0] sm:$0xff]
  %v76 = vld [vmem:[%s0 + $0x1e8] sm:$0xff]
  %v77 = vld [vmem:[%s0 + $0x1f0] sm:$0xff]
  %v78 = vld [vmem:[%s0 + $0x1f8] sm:$0xff]
  %v79 = vld [vmem:[%s0 + $0x200] sm:$0xff]
  %v80 = vld [vmem:[%s0 + $0x208] sm:$0xff]
  %v81 = vld [vmem:[%s0 + $0x210] sm:$0xff]
  %v82 = vld [vmem:[%s0 + $0x218] sm:$0xff]
  %v83 = vld [vmem:[%s0 + $0x220] sm:$0xff]
  %v84 = vld [vmem:[%s0 + $0x228] sm:$0xff]
  %v85 = vld [vmem:[%s0 + $0x230] sm:$0xff]
  %v86 = vld [vmem:[%s0 + $0x238] sm:$0xff]
  %v87 = vld [vmem:[%s0 + $0x240] sm:$0xff]
  %v88 = vld [vmem:[%s0 + $0x248] sm:$0xff]
  %v89 = vld [vmem:[%s0 + $0x250] sm:$0xff]
  %v90 = vld [vmem:[%s0 + $0x258] sm:$0xff]
  %v91 = vld [vmem:[%s0 + $0x260] sm:$0xff]
  %v92 = vld [vmem:[%s0 + $0x268] sm:$0xff]
  %v93 = vld [vmem:[%s0 + $0x270] sm:$0xff]
  %v94 = vld [vmem:[%s0 + $0x278] sm:$0xff]
  %v95 = vld [vmem:[%s0 + $0x280] sm:$0xff]
  %v96 = vld [vmem:[%s0 + $0x288] sm:$0xff]
  %v97 = vld [vmem:[%s0 + $0x290] sm:$0xff]
  %v98 = vld [vmem:[%s0 + $0x298] sm:$0xff]
  %v99 = vld [vmem:[%s0 + $0x2a0] sm:$0xff]
  %v100 = vld [vmem:[%s0 + $0x2a8] sm:$0xff]
  %v101 = vld [vmem:[%s0 + $0x2b0] sm:$0xff]
  %v102 = vld [vmem:[%s0 + $0x2b8] sm:$0xff]
  %v103 = vld [vmem:[%s0 + $0x2c0] sm:$0xff]
  %v104 = vld [vmem:[%s0 + $0x2c8] sm:$0xff]
  %v105 = vld [vmem:[%s0 + $0x2d0] sm:$0xff]
  %v106 = vld [vmem:[%s0 + $0x2d8] sm:$0xff]
  %v107 = vld [vmem:[%s0 + $0x2e0] sm:$0xff]
  %v108 = vld [vmem:[%s0 + $0x2e8] sm:$0xff]
  %v109 = vld [vmem:[%s0 + $0x2f0] sm:$0xff]
  %v110 = vld [vmem:[%s0 + $0x2f8] sm:$0xff]
  %v111 = vpack.c.bf16 %v21, %v15
  %v112 = vpack.c.bf16 %v22, %v16
  %v113 = vpack.c.bf16 %v23, %v17
  %v114 = vpack.c.bf16 %v24, %v18
  %v115 = vpack.c.bf16 %v25, %v19
  %v116 = vpack.c.bf16 %v26, %v20
  %v117 = vpack.c.bf16 %v33, %v27
  %v118 = vpack.c.bf16 %v34, %v28
  %v119 = vpack.c.bf16 %v35, %v29
  %v120 = vpack.c.bf16 %v36, %v30
  %v121 = vpack.c.bf16 %v37, %v31
  %v122 = vpack.c.bf16 %v38, %v32
  %v123 = vpack.c.bf16 %v45, %v39
  %v124 = vpack.c.bf16 %v46, %v40
  %v125 = vpack.c.bf16 %v47, %v41
  %v126 = vpack.c.bf16 %v48, %v42
  %v127 = vpack.c.bf16 %v49, %v43
  %v128 = vpack.c.bf16 %v50, %v44
  %v129 = vpack.c.bf16 %v57, %v51
  %v130 = vpack.c.bf16 %v58, %v52
  %v131 = vpack.c.bf16 %v59, %v53
  %v132 = vpack.c.bf16 %v60, %v54
  %v133 = vpack.c.bf16 %v61, %v55
  %v134 = vpack.c.bf16 %v62, %v56
  %v135 = vpack.c.bf16 %v69, %v63
  %v136 = vpack.c.bf16 %v70, %v64
  %v137 = vpack.c.bf16 %v71, %v65
  %v138 = vpack.c.bf16 %v72, %v66
  %v139 = vpack.c.bf16 %v73, %v67
  %v140 = vpack.c.bf16 %v74, %v68
  %v141 = vpack.c.bf16 %v81, %v75
  %v142 = vpack.c.bf16 %v82, %v76
  %v143 = vpack.c.bf16 %v83, %v77
  %v144 = vpack.c.bf16 %v84, %v78
  %v145 = vpack.c.bf16 %v85, %v79
  %v146 = vpack.c.bf16 %v86, %v80
  %v147 = vpack.c.bf16 %v93, %v87
  %v148 = vpack.c.bf16 %v94, %v88
  %v149 = vpack.c.bf16 %v95, %v89
  %v150 = vpack.c.bf16 %v96, %v90
  %v151 = vpack.c.bf16 %v97, %v91
  %v152 = vpack.c.bf16 %v98, %v92
  %v153 = vpack.c.bf16 %v105, %v99
  %v154 = vpack.c.bf16 %v106, %v100
  %v155 = vpack.c.bf16 %v107, %v101
  %v156 = vpack.c.bf16 %v108, %v102
  %v157 = vpack.c.bf16 %v109, %v103
  %v158 = vpack.c.bf16 %v110, %v104
  %v159 = vld [vmem:[%s1] sm:$0xf]
  %v160 = vld [vmem:[%s1 + $0x4] sm:$0xf]
  %v161 = vld [vmem:[%s1 + $0x8] sm:$0xf]
  %v162 = vld [vmem:[%s1 + $0xc] sm:$0xf]
  %v163 = vld [vmem:[%s1 + $0x10] sm:$0xf]
  %v164 = vld [vmem:[%s1 + $0x14] sm:$0xf]
  %v165 = vld [vmem:[%s1 + $0x18] sm:$0xf]
  %v166 = vld [vmem:[%s1 + $0x1c] sm:$0xf]
  %v167 = vld [vmem:[%s1 + $0x20] sm:$0xf]
  %v168 = vld [vmem:[%s1 + $0x24] sm:$0xf]
  %v169 = vld [vmem:[%s1 + $0x28] sm:$0xf]
  %v170 = vld [vmem:[%s1 + $0x2c] sm:$0xf]
  %v171 = vld [vmem:[%s1 + $0x30] sm:$0xf]
  %v172 = vld [vmem:[%s1 + $0x34] sm:$0xf]
  %v173 = vld [vmem:[%s1 + $0x38] sm:$0xf]
  %v174 = vld [vmem:[%s1 + $0x3c] sm:$0xf]
  %v175 = vld [vmem:[%s1 + $0x40] sm:$0xf]
  %v176 = vld [vmem:[%s1 + $0x44] sm:$0xf]
  %v177 = vld [vmem:[%s1 + $0x48] sm:$0xf]
  %v178 = vld [vmem:[%s1 + $0x4c] sm:$0xf]
  %v179 = vld [vmem:[%s1 + $0x50] sm:$0xf]
  %v180 = vld [vmem:[%s1 + $0x54] sm:$0xf]
  %v181 = vld [vmem:[%s1 + $0x58] sm:$0xf]
  %v182 = vld [vmem:[%s1 + $0x5c] sm:$0xf]
  %v183 = vld [vmem:[%s1 + $0x60] sm:$0xf]
  %v184 = vld [vmem:[%s1 + $0x64] sm:$0xf]
  %v185 = vld [vmem:[%s1 + $0x68] sm:$0xf]
  %v186 = vld [vmem:[%s1 + $0x6c] sm:$0xf]
  %v187 = vld [vmem:[%s1 + $0x70] sm:$0xf]
  %v188 = vld [vmem:[%s1 + $0x74] sm:$0xf]
  %v189 = vld [vmem:[%s1 + $0x78] sm:$0xf]
  %v190 = vld [vmem:[%s1 + $0x7c] sm:$0xf]
  %v191 = vld [vmem:[%s1 + $0x80] sm:$0xf]
  %v192 = vld [vmem:[%s1 + $0x84] sm:$0xf]
  %v193 = vld [vmem:[%s1 + $0x88] sm:$0xf]
  %v194 = vld [vmem:[%s1 + $0x8c] sm:$0xf]
  %v195 = vld [vmem:[%s1 + $0x90] sm:$0xf]
  %v196 = vld [vmem:[%s1 + $0x94] sm:$0xf]
  %v197 = vld [vmem:[%s1 + $0x98] sm:$0xf]
  %v198 = vld [vmem:[%s1 + $0x9c] sm:$0xf]
  %v199 = vld [vmem:[%s1 + $0xa0] sm:$0xf]
  %v200 = vld [vmem:[%s1 + $0xa4] sm:$0xf]
  %v201 = vld [vmem:[%s1 + $0xa8] sm:$0xf]
  %v202 = vld [vmem:[%s1 + $0xac] sm:$0xf]
  %v203 = vld [vmem:[%s1 + $0xb0] sm:$0xf]
  %v204 = vld [vmem:[%s1 + $0xb4] sm:$0xf]
  %v205 = vld [vmem:[%s1 + $0xb8] sm:$0xf]
  %v206 = vld [vmem:[%s1 + $0xbc] sm:$0xf]
  %v207 = vld [vmem:[%s1 + $0xc0] sm:$0xf]
  %v208 = vld [vmem:[%s1 + $0xc4] sm:$0xf]
  %v209 = vld [vmem:[%s1 + $0xc8] sm:$0xf]
  %v210 = vld [vmem:[%s1 + $0xcc] sm:$0xf]
  %v211 = vld [vmem:[%s1 + $0xd0] sm:$0xf]
  %v212 = vld [vmem:[%s1 + $0xd4] sm:$0xf]
  %v213 = vld [vmem:[%s1 + $0xd8] sm:$0xf]
  %v214 = vld [vmem:[%s1 + $0xdc] sm:$0xf]
  %v215 = vld [vmem:[%s1 + $0xe0] sm:$0xf]
  %v216 = vld [vmem:[%s1 + $0xe4] sm:$0xf]
  %v217 = vld [vmem:[%s1 + $0xe8] sm:$0xf]
  %v218 = vld [vmem:[%s1 + $0xec] sm:$0xf]
  %v219 = vld [vmem:[%s1 + $0xf0] sm:$0xf]
  %v220 = vld [vmem:[%s1 + $0xf4] sm:$0xf]
  %v221 = vld [vmem:[%s1 + $0xf8] sm:$0xf]
  %v222 = vld [vmem:[%s1 + $0xfc] sm:$0xf]
  %v223 = vld [vmem:[%s1 + $0x100] sm:$0xf]
  %v224 = vld [vmem:[%s1 + $0x104] sm:$0xf]
  %v225 = vld [vmem:[%s1 + $0x108] sm:$0xf]
  %v226 = vld [vmem:[%s1 + $0x10c] sm:$0xf]
  %v227 = vld [vmem:[%s1 + $0x110] sm:$0xf]
  %v228 = vld [vmem:[%s1 + $0x114] sm:$0xf]
  %v229 = vld [vmem:[%s1 + $0x118] sm:$0xf]
  %v230 = vld [vmem:[%s1 + $0x11c] sm:$0xf]
  %v231 = vld [vmem:[%s1 + $0x120] sm:$0xf]
  %v232 = vld [vmem:[%s1 + $0x124] sm:$0xf]
  %v233 = vld [vmem:[%s1 + $0x128] sm:$0xf]
  %v234 = vld [vmem:[%s1 + $0x12c] sm:$0xf]
  %v235 = vld [vmem:[%s1 + $0x130] sm:$0xf]
  %v236 = vld [vmem:[%s1 + $0x134] sm:$0xf]
  %v237 = vld [vmem:[%s1 + $0x138] sm:$0xf]
  %v238 = vld [vmem:[%s1 + $0x13c] sm:$0xf]
  %v239 = vld [vmem:[%s1 + $0x140] sm:$0xf]
  %v240 = vld [vmem:[%s1 + $0x144] sm:$0xf]
  %v241 = vld [vmem:[%s1 + $0x148] sm:$0xf]
  %v242 = vld [vmem:[%s1 + $0x14c] sm:$0xf]
  %v243 = vld [vmem:[%s1 + $0x150] sm:$0xf]
  %v244 = vld [vmem:[%s1 + $0x154] sm:$0xf]
  %v245 = vld [vmem:[%s1 + $0x158] sm:$0xf]
  %v246 = vld [vmem:[%s1 + $0x15c] sm:$0xf]
  %v247 = vld [vmem:[%s1 + $0x160] sm:$0xf]
  %v248 = vld [vmem:[%s1 + $0x164] sm:$0xf]
  %v249 = vld [vmem:[%s1 + $0x168] sm:$0xf]
  %v250 = vld [vmem:[%s1 + $0x16c] sm:$0xf]
  %v251 = vld [vmem:[%s1 + $0x170] sm:$0xf]
  %v252 = vld [vmem:[%s1 + $0x174] sm:$0xf]
  %v253 = vld [vmem:[%s1 + $0x178] sm:$0xf]
  %v254 = vld [vmem:[%s1 + $0x17c] sm:$0xf]
  %v255 = vld [vmem:[%s2] sm:$0x1]
  %v257 = vlaneseq
  %v258 = vshrl.u32 %v257, 7
  %v259 = vsub.s32 0, %v258
  %v260 = vrot.slane %v255, %v259
  %v358 = vunpack.c.l.b16 %v159
  %v359 = vunpack.c.l.b16 %v160
  %v360 = vunpack.c.l.b16 %v161
  %v361 = vunpack.c.l.b16 %v162
  %v362 = vunpack.c.l.b16 %v163
  %v363 = vunpack.c.l.b16 %v164
  %v364 = vunpack.c.l.b16 %v165
  %v365 = vunpack.c.l.b16 %v166
  %v366 = vunpack.c.l.b16 %v167
  %v367 = vunpack.c.l.b16 %v168
  %v368 = vunpack.c.l.b16 %v169
  %v369 = vunpack.c.l.b16 %v170
  %v370 = vunpack.c.l.b16 %v171
  %v371 = vunpack.c.l.b16 %v172
  %v372 = vunpack.c.l.b16 %v173
  %v373 = vunpack.c.l.b16 %v174
  %v374 = vunpack.c.l.b16 %v175
  %v375 = vunpack.c.l.b16 %v176
  %v376 = vunpack.c.l.b16 %v177
  %v377 = vunpack.c.l.b16 %v178
  %v378 = vunpack.c.l.b16 %v179
  %v379 = vunpack.c.l.b16 %v180
  %v380 = vunpack.c.l.b16 %v181
  %v381 = vunpack.c.l.b16 %v182
  %v382 = vunpack.c.l.b16 %v183
  %v383 = vunpack.c.l.b16 %v184
  %v384 = vunpack.c.l.b16 %v185
  %v385 = vunpack.c.l.b16 %v186
  %v386 = vunpack.c.l.b16 %v187
  %v387 = vunpack.c.l.b16 %v188
  %v388 = vunpack.c.l.b16 %v189
  %v389 = vunpack.c.l.b16 %v190
  %v390 = vunpack.c.l.b16 %v191
  %v391 = vunpack.c.l.b16 %v192
  %v392 = vunpack.c.l.b16 %v193
  %v393 = vunpack.c.l.b16 %v194
  %v394 = vunpack.c.l.b16 %v195
  %v395 = vunpack.c.l.b16 %v196
  %v396 = vunpack.c.l.b16 %v197
  %v397 = vunpack.c.l.b16 %v198
  %v398 = vunpack.c.l.b16 %v199
  %v399 = vunpack.c.l.b16 %v200
  %v400 = vunpack.c.l.b16 %v201
  %v401 = vunpack.c.l.b16 %v202
  %v402 = vunpack.c.l.b16 %v203
  %v403 = vunpack.c.l.b16 %v204
  %v404 = vunpack.c.l.b16 %v205
  %v405 = vunpack.c.l.b16 %v206
  %v406 = vunpack.c.l.b16 %v207
  %v407 = vunpack.c.l.b16 %v208
  %v408 = vunpack.c.l.b16 %v209
  %v409 = vunpack.c.l.b16 %v210
  %v410 = vunpack.c.l.b16 %v211
  %v411 = vunpack.c.l.b16 %v212
  %v412 = vunpack.c.l.b16 %v213
  %v413 = vunpack.c.l.b16 %v214
  %v414 = vunpack.c.l.b16 %v215
  %v415 = vunpack.c.l.b16 %v216
  %v416 = vunpack.c.l.b16 %v217
  %v417 = vunpack.c.l.b16 %v218
  %v418 = vunpack.c.l.b16 %v219
  %v419 = vunpack.c.l.b16 %v220
  %v420 = vunpack.c.l.b16 %v221
  %v421 = vunpack.c.l.b16 %v222
  %v422 = vunpack.c.l.b16 %v223
  %v423 = vunpack.c.l.b16 %v224
  %v424 = vunpack.c.l.b16 %v225
  %v425 = vunpack.c.l.b16 %v226
  %v426 = vunpack.c.l.b16 %v227
  %v427 = vunpack.c.l.b16 %v228
  %v428 = vunpack.c.l.b16 %v229
  %v429 = vunpack.c.l.b16 %v230
  %v430 = vunpack.c.l.b16 %v231
  %v431 = vunpack.c.l.b16 %v232
  %v432 = vunpack.c.l.b16 %v233
  %v433 = vunpack.c.l.b16 %v234
  %v434 = vunpack.c.l.b16 %v235
  %v435 = vunpack.c.l.b16 %v236
  %v436 = vunpack.c.l.b16 %v237
  %v437 = vunpack.c.l.b16 %v238
  %v438 = vunpack.c.l.b16 %v239
  %v439 = vunpack.c.l.b16 %v240
  %v440 = vunpack.c.l.b16 %v241
  %v441 = vunpack.c.l.b16 %v242
  %v442 = vunpack.c.l.b16 %v243
  %v443 = vunpack.c.l.b16 %v244
  %v444 = vunpack.c.l.b16 %v245
  %v445 = vunpack.c.l.b16 %v246
  %v446 = vunpack.c.l.b16 %v247
  %v447 = vunpack.c.l.b16 %v248
  %v448 = vunpack.c.l.b16 %v249
  %v449 = vunpack.c.l.b16 %v250
  %v450 = vunpack.c.l.b16 %v251
  %v451 = vunpack.c.l.b16 %v252
  %v452 = vunpack.c.l.b16 %v253
  %v453 = vunpack.c.l.b16 %v254
  %v454 = vpack.c.b16 %v359, %v358
  %v455 = vpack.c.b16 %v361, %v360
  %v456 = vpack.c.b16 %v363, %v362
  %v457 = vpack.c.b16 %v365, %v364
  %v458 = vpack.c.b16 %v367, %v366
  %v459 = vpack.c.b16 %v369, %v368
  %v460 = vpack.c.b16 %v371, %v370
  %v461 = vpack.c.b16 %v373, %v372
  %v462 = vpack.c.b16 %v375, %v374
  %v463 = vpack.c.b16 %v377, %v376
  %v464 = vpack.c.b16 %v379, %v378
  %v465 = vpack.c.b16 %v381, %v380
  %v466 = vpack.c.b16 %v383, %v382
  %v467 = vpack.c.b16 %v385, %v384
  %v468 = vpack.c.b16 %v387, %v386
  %v469 = vpack.c.b16 %v389, %v388
  %v470 = vpack.c.b16 %v391, %v390
  %v471 = vpack.c.b16 %v393, %v392
  %v472 = vpack.c.b16 %v395, %v394
  %v473 = vpack.c.b16 %v397, %v396
  %v474 = vpack.c.b16 %v399, %v398
  %v475 = vpack.c.b16 %v401, %v400
  %v476 = vpack.c.b16 %v403, %v402
  %v477 = vpack.c.b16 %v405, %v404
  %v478 = vpack.c.b16 %v407, %v406
  %v479 = vpack.c.b16 %v409, %v408
  %v480 = vpack.c.b16 %v411, %v410
  %v481 = vpack.c.b16 %v413, %v412
  %v482 = vpack.c.b16 %v415, %v414
  %v483 = vpack.c.b16 %v417, %v416
  %v484 = vpack.c.b16 %v419, %v418
  %v485 = vpack.c.b16 %v421, %v420
  %v486 = vpack.c.b16 %v423, %v422
  %v487 = vpack.c.b16 %v425, %v424
  %v488 = vpack.c.b16 %v427, %v426
  %v489 = vpack.c.b16 %v429, %v428
  %v490 = vpack.c.b16 %v431, %v430
  %v491 = vpack.c.b16 %v433, %v432
  %v492 = vpack.c.b16 %v435, %v434
  %v493 = vpack.c.b16 %v437, %v436
  %v494 = vpack.c.b16 %v439, %v438
  %v495 = vpack.c.b16 %v441, %v440
  %v496 = vpack.c.b16 %v443, %v442
  %v497 = vpack.c.b16 %v445, %v444
  %v498 = vpack.c.b16 %v447, %v446
  %v499 = vpack.c.b16 %v449, %v448
  %v500 = vpack.c.b16 %v451, %v450
  %v501 = vpack.c.b16 %v453, %v452
  %550 = vmatprep.subr.bf16.mxu0 0
  %551 = vmatpush1.bf16.msra.mxu0 %v461
  %552 = vmatprep.subr.bf16.mxu0 0
  %553 = vmatpush1.bf16.msra.mxu0 %v460
  %554 = vmatprep.subr.bf16.mxu0 0
  %555 = vmatpush1.bf16.msra.mxu0 %v459
  %556 = vmatprep.subr.bf16.mxu0 0
  %557 = vmatpush1.bf16.msra.mxu0 %v458
  %558 = vmatprep.subr.bf16.mxu0 0
  %559 = vmatpush1.bf16.msra.mxu0 %v457
  %560 = vmatprep.subr.bf16.mxu0 0
  %561 = vmatpush1.bf16.msra.mxu0 %v456
  %562 = vmatprep.subr.bf16.mxu0 0
  %563 = vmatpush1.bf16.msra.mxu0 %v455
  %564 = vmatprep.subr.bf16.mxu0 0
  %565 = vmatpush1.bf16.msra.mxu0 %v454
  %566 = vmatprep.subr.bf16.mxu0 0
  %567 = vmatpush2.bf16.msra.mxu0 %v469
  %568 = vmatprep.subr.bf16.mxu0 0
  %569 = vmatpush2.bf16.msra.mxu0 %v468
  %570 = vmatprep.subr.bf16.mxu0 0
  %571 = vmatpush2.bf16.msra.mxu0 %v467
  %572 = vmatprep.subr.bf16.mxu0 0
  %573 = vmatpush2.bf16.msra.mxu0 %v466
  %574 = vmatprep.subr.bf16.mxu0 0
  %575 = vmatpush2.bf16.msra.mxu0 %v465
  %576 = vmatprep.subr.bf16.mxu0 0
  %577 = vmatpush2.bf16.msra.mxu0 %v464
  %578 = vmatprep.subr.bf16.mxu0 0
  %579 = vmatpush2.bf16.msra.mxu0 %v463
  %580 = vmatprep.subr.bf16.mxu0 0
  %581 = vmatpush2.bf16.msra.mxu0 %v462
  %582 = vmatprep.mubr.bf16.mxu0 %v112
  %583 = vmatmul.mubr.bf16.gmra.mxu0 %v111
  %v584 = vpop.f32.mrf.mxu0
  %v585 = vadd.f32 %v260, %v584
  %v586 = vpop.f32.mrf.mxu0
  %v587 = vpop.f32.mrf.mxu0
  %v588 = vadd.f32 %v260, %v587
  %v589 = vpop.f32.mrf.mxu0
  %590 = vmatprep.mubr.bf16.mxu0 %v118
  %591 = vmatmul.mubr.bf16.gmra.mxu0 %v117
  %v592 = vpop.f32.mrf.mxu0
  %v593 = vadd.f32 %v260, %v592
  %v594 = vpop.f32.mrf.mxu0
  %v595 = vpop.f32.mrf.mxu0
  %v596 = vadd.f32 %v260, %v595
  %v597 = vpop.f32.mrf.mxu0
  %598 = vmatprep.mubr.bf16.mxu0 %v124
  %599 = vmatmul.mubr.bf16.gmra.mxu0 %v123
  %v600 = vpop.f32.mrf.mxu0
  %v601 = vadd.f32 %v260, %v600
  %v602 = vpop.f32.mrf.mxu0
  %v603 = vpop.f32.mrf.mxu0
  %v604 = vadd.f32 %v260, %v603
  %v605 = vpop.f32.mrf.mxu0
  %606 = vmatprep.mubr.bf16.mxu0 %v130
  %607 = vmatmul.mubr.bf16.gmra.mxu0 %v129
  %v608 = vpop.f32.mrf.mxu0
  %v609 = vadd.f32 %v260, %v608
  %v610 = vpop.f32.mrf.mxu0
  %v611 = vpop.f32.mrf.mxu0
  %v612 = vadd.f32 %v260, %v611
  %v613 = vpop.f32.mrf.mxu0
  %614 = vmatprep.mubr.bf16.mxu0 %v136
  %615 = vmatmul.mubr.bf16.gmra.mxu0 %v135
  %v616 = vpop.f32.mrf.mxu0
  %v617 = vadd.f32 %v260, %v616
  %v618 = vpop.f32.mrf.mxu0
  %v619 = vpop.f32.mrf.mxu0
  %v620 = vadd.f32 %v260, %v619
  %v621 = vpop.f32.mrf.mxu0
  %622 = vmatprep.mubr.bf16.mxu0 %v142
  %623 = vmatmul.mubr.bf16.gmra.mxu0 %v141
  %v624 = vpop.f32.mrf.mxu0
  %v625 = vadd.f32 %v260, %v624
  %v626 = vpop.f32.mrf.mxu0
  %v627 = vpop.f32.mrf.mxu0
  %v628 = vadd.f32 %v260, %v627
  %v629 = vpop.f32.mrf.mxu0
  %630 = vmatprep.mubr.bf16.mxu0 %v148
  %631 = vmatmul.mubr.bf16.gmra.mxu0 %v147
  %v632 = vpop.f32.mrf.mxu0
  %v633 = vadd.f32 %v260, %v632
  %v634 = vpop.f32.mrf.mxu0
  %v635 = vpop.f32.mrf.mxu0
  %v636 = vadd.f32 %v260, %v635
  %v637 = vpop.f32.mrf.mxu0
  %638 = vmatprep.mubr.bf16.mxu0 %v154
  %639 = vmatmul.mubr.bf16.gmra.mxu0 %v153
  %v640 = vpop.f32.mrf.mxu0
  %v641 = vadd.f32 %v260, %v640
  %v642 = vpop.f32.mrf.mxu0
  %v643 = vpop.f32.mrf.mxu0
  %v644 = vadd.f32 %v260, %v643
  %v645 = vpop.f32.mrf.mxu0
  %646 = vdwg.mxu0
  %647 = vmatprep.subr.bf16.mxu0 0
  %648 = vmatpush1.bf16.msra.mxu0 %v477
  %649 = vmatprep.subr.bf16.mxu0 0
  %650 = vmatpush1.bf16.msra.mxu0 %v476
  %651 = vmatprep.subr.bf16.mxu0 0
  %652 = vmatpush1.bf16.msra.mxu0 %v475
  %653 = vmatprep.subr.bf16.mxu0 0
  %654 = vmatpush1.bf16.msra.mxu0 %v474
  %655 = vmatprep.subr.bf16.mxu0 0
  %656 = vmatpush1.bf16.msra.mxu0 %v473
  %657 = vmatprep.subr.bf16.mxu0 0
  %658 = vmatpush1.bf16.msra.mxu0 %v472
  %659 = vmatprep.subr.bf16.mxu0 0
  %660 = vmatpush1.bf16.msra.mxu0 %v471
  %661 = vmatprep.subr.bf16.mxu0 0
  %662 = vmatpush1.bf16.msra.mxu0 %v470
  %663 = vmatprep.subr.bf16.mxu0 0
  %664 = vmatpush2.bf16.msra.mxu0 %v485
  %665 = vmatprep.subr.bf16.mxu0 0
  %666 = vmatpush2.bf16.msra.mxu0 %v484
  %667 = vmatprep.subr.bf16.mxu0 0
  %668 = vmatpush2.bf16.msra.mxu0 %v483
  %669 = vmatprep.subr.bf16.mxu0 0
  %670 = vmatpush2.bf16.msra.mxu0 %v482
  %671 = vmatprep.subr.bf16.mxu0 0
  %672 = vmatpush2.bf16.msra.mxu0 %v481
  %673 = vmatprep.subr.bf16.mxu0 0
  %674 = vmatpush2.bf16.msra.mxu0 %v480
  %675 = vmatprep.subr.bf16.mxu0 0
  %676 = vmatpush2.bf16.msra.mxu0 %v479
  %677 = vmatprep.subr.bf16.mxu0 0
  %678 = vmatpush2.bf16.msra.mxu0 %v478
  %679 = vmatprep.mubr.bf16.mxu0 %v114
  %680 = vmatmul.mubr.bf16.gmra.mxu0 %v113
  %v681 = vpop.f32.mrf.mxu0
  %v682 = vadd.f32 %v585, %v681
  %v683 = vpop.f32.mrf.mxu0
  %v684 = vpop.f32.mrf.mxu0
  %v685 = vadd.f32 %v588, %v684
  %v686 = vpop.f32.mrf.mxu0
  %687 = vmatprep.mubr.bf16.mxu0 %v120
  %688 = vmatmul.mubr.bf16.gmra.mxu0 %v119
  %v689 = vpop.f32.mrf.mxu0
  %v690 = vadd.f32 %v593, %v689
  %v691 = vpop.f32.mrf.mxu0
  %v692 = vpop.f32.mrf.mxu0
  %v693 = vadd.f32 %v596, %v692
  %v694 = vpop.f32.mrf.mxu0
  %695 = vmatprep.mubr.bf16.mxu0 %v126
  %696 = vmatmul.mubr.bf16.gmra.mxu0 %v125
  %v697 = vpop.f32.mrf.mxu0
  %v698 = vadd.f32 %v601, %v697
  %v699 = vpop.f32.mrf.mxu0
  %v700 = vpop.f32.mrf.mxu0
  %v701 = vadd.f32 %v604, %v700
  %v702 = vpop.f32.mrf.mxu0
  %703 = vmatprep.mubr.bf16.mxu0 %v132
  %704 = vmatmul.mubr.bf16.gmra.mxu0 %v131
  %v705 = vpop.f32.mrf.mxu0
  %v706 = vadd.f32 %v609, %v705
  %v707 = vpop.f32.mrf.mxu0
  %v708 = vpop.f32.mrf.mxu0
  %v709 = vadd.f32 %v612, %v708
  %v710 = vpop.f32.mrf.mxu0
  %711 = vmatprep.mubr.bf16.mxu0 %v138
  %712 = vmatmul.mubr.bf16.gmra.mxu0 %v137
  %v713 = vpop.f32.mrf.mxu0
  %v714 = vadd.f32 %v617, %v713
  %v715 = vpop.f32.mrf.mxu0
  %v716 = vpop.f32.mrf.mxu0
  %v717 = vadd.f32 %v620, %v716
  %v718 = vpop.f32.mrf.mxu0
  %719 = vmatprep.mubr.bf16.mxu0 %v144
  %720 = vmatmul.mubr.bf16.gmra.mxu0 %v143
  %v721 = vpop.f32.mrf.mxu0
  %v722 = vadd.f32 %v625, %v721
  %v723 = vpop.f32.mrf.mxu0
  %v724 = vpop.f32.mrf.mxu0
  %v725 = vadd.f32 %v628, %v724
  %v726 = vpop.f32.mrf.mxu0
  %727 = vmatprep.mubr.bf16.mxu0 %v150
  %728 = vmatmul.mubr.bf16.gmra.mxu0 %v149
  %v729 = vpop.f32.mrf.mxu0
  %v730 = vadd.f32 %v633, %v729
  %v731 = vpop.f32.mrf.mxu0
  %v732 = vpop.f32.mrf.mxu0
  %v733 = vadd.f32 %v636, %v732
  %v734 = vpop.f32.mrf.mxu0
  %735 = vmatprep.mubr.bf16.mxu0 %v156
  %736 = vmatmul.mubr.bf16.gmra.mxu0 %v155
  %v737 = vpop.f32.mrf.mxu0
  %v738 = vadd.f32 %v641, %v737
  %v739 = vpop.f32.mrf.mxu0
  %v740 = vpop.f32.mrf.mxu0
  %v741 = vadd.f32 %v644, %v740
  %v742 = vpop.f32.mrf.mxu0
  %743 = vdwg.mxu0
  %744 = vmatprep.subr.bf16.mxu0 0
  %745 = vmatpush1.bf16.msra.mxu0 %v493
  %746 = vmatprep.subr.bf16.mxu0 0
  %747 = vmatpush1.bf16.msra.mxu0 %v492
  %748 = vmatprep.subr.bf16.mxu0 0
  %749 = vmatpush1.bf16.msra.mxu0 %v491
  %750 = vmatprep.subr.bf16.mxu0 0
  %751 = vmatpush1.bf16.msra.mxu0 %v490
  %752 = vmatprep.subr.bf16.mxu0 0
  %753 = vmatpush1.bf16.msra.mxu0 %v489
  %754 = vmatprep.subr.bf16.mxu0 0
  %755 = vmatpush1.bf16.msra.mxu0 %v488
  %756 = vmatprep.subr.bf16.mxu0 0
  %757 = vmatpush1.bf16.msra.mxu0 %v487
  %758 = vmatprep.subr.bf16.mxu0 0
  %759 = vmatpush1.bf16.msra.mxu0 %v486
  %760 = vmatprep.subr.bf16.mxu0 0
  %761 = vmatpush2.bf16.msra.mxu0 %v501
  %762 = vmatprep.subr.bf16.mxu0 0
  %763 = vmatpush2.bf16.msra.mxu0 %v500
  %764 = vmatprep.subr.bf16.mxu0 0
  %765 = vmatpush2.bf16.msra.mxu0 %v499
  %766 = vmatprep.subr.bf16.mxu0 0
  %767 = vmatpush2.bf16.msra.mxu0 %v498
  %768 = vmatprep.subr.bf16.mxu0 0
  %769 = vmatpush2.bf16.msra.mxu0 %v497
  %770 = vmatprep.subr.bf16.mxu0 0
  %771 = vmatpush2.bf16.msra.mxu0 %v496
  %772 = vmatprep.subr.bf16.mxu0 0
  %773 = vmatpush2.bf16.msra.mxu0 %v495
  %774 = vmatprep.subr.bf16.mxu0 0
  %775 = vmatpush2.bf16.msra.mxu0 %v494
  %776 = vmatprep.mubr.bf16.mxu0 %v116
  %777 = vmatmul.mubr.bf16.gmra.mxu0 %v115
  %v778 = vpop.f32.mrf.mxu0
  %v779 = vadd.f32 %v682, %v778
  %v780 = vpop.f32.mrf.mxu0
  %v781 = vpop.f32.mrf.mxu0
  %v782 = vadd.f32 %v685, %v781
  %v783 = vpop.f32.mrf.mxu0
  %784 = vmatprep.mubr.bf16.mxu0 %v122
  %785 = vmatmul.mubr.bf16.gmra.mxu0 %v121
  %v786 = vpop.f32.mrf.mxu0
  %v787 = vadd.f32 %v690, %v786
  %v788 = vpop.f32.mrf.mxu0
  %v789 = vpop.f32.mrf.mxu0
  %v790 = vadd.f32 %v693, %v789
  %v791 = vpop.f32.mrf.mxu0
  %792 = vmatprep.mubr.bf16.mxu0 %v128
  %793 = vmatmul.mubr.bf16.gmra.mxu0 %v127
  %v794 = vpop.f32.mrf.mxu0
  %v795 = vadd.f32 %v698, %v794
  %v796 = vpop.f32.mrf.mxu0
  %v797 = vpop.f32.mrf.mxu0
  %v798 = vadd.f32 %v701, %v797
  %v799 = vpop.f32.mrf.mxu0
  %800 = vmatprep.mubr.bf16.mxu0 %v134
  %801 = vmatmul.mubr.bf16.gmra.mxu0 %v133
  %v802 = vpop.f32.mrf.mxu0
  %v803 = vadd.f32 %v706, %v802
  %v804 = vpop.f32.mrf.mxu0
  %v805 = vpop.f32.mrf.mxu0
  %v806 = vadd.f32 %v709, %v805
  %v807 = vpop.f32.mrf.mxu0
  %808 = vmatprep.mubr.bf16.mxu0 %v140
  %809 = vmatmul.mubr.bf16.gmra.mxu0 %v139
  %v810 = vpop.f32.mrf.mxu0
  %v811 = vadd.f32 %v714, %v810
  %v812 = vpop.f32.mrf.mxu0
  %v813 = vpop.f32.mrf.mxu0
  %v814 = vadd.f32 %v717, %v813
  %v815 = vpop.f32.mrf.mxu0
  %816 = vmatprep.mubr.bf16.mxu0 %v146
  %817 = vmatmul.mubr.bf16.gmra.mxu0 %v145
  %v818 = vpop.f32.mrf.mxu0
  %v819 = vadd.f32 %v722, %v818
  %v820 = vpop.f32.mrf.mxu0
  %v821 = vpop.f32.mrf.mxu0
  %v822 = vadd.f32 %v725, %v821
  %v823 = vpop.f32.mrf.mxu0
  %824 = vmatprep.mubr.bf16.mxu0 %v152
  %825 = vmatmul.mubr.bf16.gmra.mxu0 %v151
  %v826 = vpop.f32.mrf.mxu0
  %v827 = vadd.f32 %v730, %v826
  %v828 = vpop.f32.mrf.mxu0
  %v829 = vpop.f32.mrf.mxu0
  %v830 = vadd.f32 %v733, %v829
  %v831 = vpop.f32.mrf.mxu0
  %832 = vmatprep.mubr.bf16.mxu0 %v158
  %833 = vmatmul.mubr.bf16.gmra.mxu0 %v157
  %v834 = vpop.f32.mrf.mxu0
  %v835 = vadd.f32 %v738, %v834
  %v836 = vpop.f32.mrf.mxu0
  %v837 = vpop.f32.mrf.mxu0
  %v838 = vadd.f32 %v741, %v837
  %v839 = vpop.f32.mrf.mxu0
  %840 = vdwg.mxu0
  %841 = vxpose.xlu0.b32.start [1/16] %v779, 128
  %842 = vxpose.xlu0.b32.cont [2/16] %v782, 128
  %843 = vxpose.xlu0.b32.cont [3/16] %v787, 128
  %844 = vxpose.xlu0.b32.cont [4/16] %v790, 128
  %845 = vxpose.xlu0.b32.cont [5/16] %v795, 128
  %846 = vxpose.xlu0.b32.cont [6/16] %v798, 128
  %847 = vxpose.xlu0.b32.cont [7/16] %v803, 128
  %848 = vxpose.xlu0.b32.cont [8/16] %v806, 128
  %849 = vxpose.xlu0.b32.cont [9/16] %v811, 128
  %850 = vxpose.xlu0.b32.cont [10/16] %v814, 128
  %851 = vxpose.xlu0.b32.cont [11/16] %v819, 128
  %852 = vxpose.xlu0.b32.cont [12/16] %v822, 128
  %853 = vxpose.xlu0.b32.cont [13/16] %v827, 128
  %854 = vxpose.xlu0.b32.cont [14/16] %v830, 128
  %855 = vxpose.xlu0.b32.cont [15/16] %v835, 128
  %856 = vxpose.xlu0.b32.end [16/16] %v838, 128
  %v857 = vpop.trf.xlu0
  %v858 = vpop.trf.xlu0
  %v859 = vpop.trf.xlu0
  %v860 = vpop.trf.xlu0
  %v861 = vpop.trf.xlu0
  %v862 = vpop.trf.xlu0
  %v863 = vpop.trf.xlu0
  %v864 = vpop.trf.xlu0
  %v865 = vpop.trf.xlu0
  %v866 = vpop.trf.xlu0
  %v867 = vpop.trf.xlu0
  %v868 = vpop.trf.xlu0
  %v869 = vpop.trf.xlu0
  %v870 = vpop.trf.xlu0
  %v871 = vpop.trf.xlu0
  %v872 = vpop.trf.xlu0
  %873 = vst [vmem:[%s3] sm:$0x1] %v857
  // Predicated region
  $region14: #{mlp_forward.1} parent=0 // pred_check
    _
  $region15: #{mlp_forward.1} parent=0 // pred_check_branch
    %875 = sbr.rel (0) target = $region17
  $region16: #{mlp_forward.1} parent=0 // pred_region
    _
  $region17: #{mlp_forward.1} parent=0 // pred_fallthru
    _
  // Predicated region
  $region18: #{mlp_forward.1} parent=0 // pred_check
    _
  $region19: #{mlp_forward.1} parent=0 // pred_check_branch
    %877 = sbr.rel (0) target = $region21
  $region20: #{mlp_forward.1} parent=0 // pred_region
    _
  $region21: #{mlp_forward.1} parent=0 // pred_fallthru
    _

</llo_original>
